<compile_context>
chip_gen: v7x
topology: tpu7x:2x2x1
jax: 0.10.0
libtpu: 0.0.40
codegen_flags: <defaults>
</compile_context>

<pallas_src>
import jax
import jax.numpy as jnp
from jax.experimental import pallas as pl
from jax.experimental.pallas import tpu as pltpu


def patch_embed_kernel(patch_ref, w_ref, b_ref, clspos_ref, pos_ref, o_ref):
    # patch_ref:  (1, N, K)   bf16 patches for one batch element
    # w_ref:      (K, TE)     bf16 flattened conv weight tile (transposed)
    # b_ref:      (1, TE)     f32 conv bias tile
    # clspos_ref: (1, TE)     f32 (class_token + pos[0]) tile
    # pos_ref:    (N, TE)     f32 pos[1:] tile
    # o_ref:      (1, N+1, TE) output tile
    n = pos_ref.shape[0]
    # MXU matmul, f32 accumulation.
    proj = jnp.dot(patch_ref[0], w_ref[...], preferred_element_type=jnp.float32)
    rows = proj + b_ref[...] + pos_ref[...]          # f32 elementwise adds
    # Two direct stores instead of a concatenate: the class row pays the odd
    # sublane offset, the big (N, TE) block stays contiguous.
    o_ref[0, pl.ds(0, 1), :] = clspos_ref[...].astype(o_ref.dtype)
    o_ref[0, pl.ds(1, n), :] = rows.astype(o_ref.dtype)


def patch_embedding(x, conv_w, conv_b, class_token, pos_embedding, patch_size,
                    *, compute_dtype=jnp.bfloat16):
    """x: [B, C, H, W] NCHW (like PyTorch). Returns [B, N+1, E]."""
    B, C, H, W = x.shape
    P = patch_size
    E = conv_w.shape[0]
    Hp, Wp = H // P, W // P
    N = Hp * Wp
    K = C * P * P

    # --- host glue: im2col (equivalent to the stride=kernel conv), in bf16 ---
    # (B, C, Hp, P, Wp, P) -> (B, Hp, Wp, C, P, P) -> (B, N, C*P*P)
    xc = x.astype(compute_dtype)
    patches = xc.reshape(B, C, Hp, P, Wp, P).transpose(0, 2, 4, 1, 3, 5).reshape(B, N, K)
    # Conv2d weight (E, C, P, P) flattened in (c, kh, kw) order -> (K, E)
    w_mat = conv_w.reshape(E, K).T.astype(compute_dtype)
    bias = conv_b.reshape(1, E).astype(jnp.float32)
    pos = pos_embedding.reshape(N + 1, E).astype(jnp.float32)
    # Batch-invariant class row precomputed on the host.
    clspos = class_token.reshape(1, E).astype(jnp.float32) + pos[:1]   # (1, E)
    pos_patches = pos[1:]                                              # (N, E)

    # Lane-dense E tiling when E allows it (real ViT: E % 128 == 0).
    if E % 256 == 0:
        TE = 256
    elif E % 128 == 0:
        TE = 128
    else:
        TE = E          # toy sizes: full-extent block (masked stores acceptable)
    n_e = E // TE

    cost = pl.CostEstimate(
        flops=2 * B * N * K * E,
        transcendentals=0,
        bytes_accessed=(patches.size * patches.dtype.itemsize
                        + w_mat.size * w_mat.dtype.itemsize
                        + B * (N + 1) * E * x.dtype.itemsize),
    )

    out = pl.pallas_call(
        patch_embed_kernel,
        out_shape=jax.ShapeDtypeStruct((B, N + 1, E), x.dtype),
        grid_spec=pltpu.PrefetchScalarGridSpec(
            num_scalar_prefetch=0,
            grid=(B, n_e),
            in_specs=[
                pl.BlockSpec((1, N, K), lambda b, j: (b, 0, 0)),   # patches
                pl.BlockSpec((K, TE), lambda b, j: (0, j)),        # weight
                pl.BlockSpec((1, TE), lambda b, j: (0, j)),        # bias
                pl.BlockSpec((1, TE), lambda b, j: (0, j)),        # cls + pos[0]
                pl.BlockSpec((N, TE), lambda b, j: (0, j)),        # pos[1:]
            ],
            out_specs=pl.BlockSpec((1, N + 1, TE), lambda b, j: (b, 0, j)),
        ),
        compiler_params=pltpu.CompilerParams(
            dimension_semantics=("parallel", "parallel")),
        cost_estimate=cost,
    )(patches, w_mat, bias, clspos, pos_patches)
    return out


if __name__ == "__main__":
    # Small shapes consistent with the module: in_channels=4, patch_size=4,
    # emb_size=32, img_size=16 -> num_patches=16, seq_len=17.
    B, C, P, E, IMG = 2, 4, 4, 32, 16
    N = (IMG // P) ** 2

    key = jax.random.PRNGKey(0)
    kx, kw, kb, kc, kp = jax.random.split(key, 5)

    x = jax.random.normal(kx, (B, C, IMG, IMG), dtype=jnp.float32)
    conv_w = jax.random.normal(kw, (E, C, P, P), dtype=jnp.float32) * 0.02
    conv_b = jax.random.normal(kb, (E,), dtype=jnp.float32) * 0.02
    class_token = jax.random.normal(kc, (1, 1, E), dtype=jnp.float32)
    pos_embedding = jax.random.normal(kp, (N + 1, E), dtype=jnp.float32)

    out = patch_embedding(x, conv_w, conv_b, class_token, pos_embedding, P)
    out = jax.block_until_ready(out)

    # Pure-JAX f32 reference (same math as the PyTorch forward).
    patches_ref = x.reshape(B, C, IMG // P, P, IMG // P, P) \
                   .transpose(0, 2, 4, 1, 3, 5).reshape(B, N, C * P * P)
    proj_ref = patches_ref @ conv_w.reshape(E, -1).T + conv_b  # (B, N, E)
    cls_rep = jnp.broadcast_to(class_token, (B, 1, E))
    ref = jnp.concatenate([cls_rep, proj_ref], axis=1) + pos_embedding

    assert out.shape == (B, N + 1, E)
    # bf16 matmul operands + f32 accumulation -> loose-ish tolerance vs f32 ref.
    assert jnp.allclose(out, ref, atol=1e-2, rtol=1e-2)
    print("KERNEL_OK")
</pallas_src>

<mosaic_0001>
module attributes {stable_mosaic.version = 11 : i64} {
  func.func @patch_embed_kernel(%arg0: i32, %arg1: i32, %arg2: memref<1x16x64xbf16, #tpu.memory_space<vmem>>, %arg3: memref<64x32xbf16, #tpu.memory_space<vmem>>, %arg4: memref<1x32xf32, #tpu.memory_space<vmem>>, %arg5: memref<1x32xf32, #tpu.memory_space<vmem>>, %arg6: memref<16x32xf32, #tpu.memory_space<vmem>>, %arg7: memref<1x17x32xf32, #tpu.memory_space<vmem>>) attributes {dimension_semantics = [#tpu.dimension_semantics<parallel>, #tpu.dimension_semantics<parallel>], iteration_bounds = array<i64: 2, 1>, scalar_prefetch = 0 : i64, scratch_operands = 0 : i64, tpu.core_type = #tpu.core_type<tc>, window_params = [{transform_indices = @transform_0, window_bounds = array<i64: 1, 16, 64>}, {transform_indices = @transform_1, window_bounds = array<i64: 64, 32>}, {transform_indices = @transform_2, window_bounds = array<i64: 1, 32>}, {transform_indices = @transform_3, window_bounds = array<i64: 1, 32>}, {transform_indices = @transform_4, window_bounds = array<i64: 16, 32>}, {transform_indices = @transform_5, window_bounds = array<i64: 1, 17, 32>}]} {
    %c0 = arith.constant 0 : index
    %c0_0 = arith.constant 0 : index
    %c0_1 = arith.constant 0 : index
    %0 = vector.load %arg2[%c0, %c0_0, %c0_1] : memref<1x16x64xbf16, #tpu.memory_space<vmem>>, vector<1x16x64xbf16>
    %1 = vector.shape_cast %0 : vector<1x16x64xbf16> to vector<16x64xbf16>
    %c0_2 = arith.constant 0 : index
    %c0_3 = arith.constant 0 : index
    %2 = vector.load %arg3[%c0_2, %c0_3] : memref<64x32xbf16, #tpu.memory_space<vmem>>, vector<64x32xbf16>
    %cst = arith.constant dense<0.000000e+00> : vector<16x32xf32>
    %3 = tpu.matmul %1, %2, %cst {dimension_numbers = #tpu.dot_dimension_numbers<[1], [0], [0], [1], [0, 0, 1, 1], [], []>} : vector<16x64xbf16>, vector<64x32xbf16>, vector<16x32xf32> -> vector<16x32xf32>
    %c0_4 = arith.constant 0 : index
    %c0_5 = arith.constant 0 : index
    %4 = vector.load %arg4[%c0_4, %c0_5] : memref<1x32xf32, #tpu.memory_space<vmem>>, vector<1x32xf32>
    %5 = vector.broadcast %4 : vector<1x32xf32> to vector<16x32xf32>
    %6 = arith.addf %3, %5 : vector<16x32xf32>
    %c0_6 = arith.constant 0 : index
    %c0_7 = arith.constant 0 : index
    %7 = vector.load %arg6[%c0_6, %c0_7] : memref<16x32xf32, #tpu.memory_space<vmem>>, vector<16x32xf32>
    %8 = arith.addf %6, %7 : vector<16x32xf32>
    %c0_8 = arith.constant 0 : index
    %c0_9 = arith.constant 0 : index
    %9 = vector.load %arg5[%c0_8, %c0_9] : memref<1x32xf32, #tpu.memory_space<vmem>>, vector<1x32xf32>
    %c0_10 = arith.constant 0 : index
    %c0_11 = arith.constant 0 : index
    %c0_12 = arith.constant 0 : index
    %10 = vector.load %arg7[%c0_10, %c0_11, %c0_12] : memref<1x17x32xf32, #tpu.memory_space<vmem>>, vector<1x1x32xf32>
    %11 = vector.shape_cast %10 : vector<1x1x32xf32> to vector<1x32xf32>
    %12 = vector.shape_cast %9 : vector<1x32xf32> to vector<1x1x32xf32>
    tpu.vector_store %arg7[%c0_10, %c0_11, %c0_12], %12 {strides = array<i32>} : memref<1x17x32xf32, #tpu.memory_space<vmem>>, vector<1x1x32xf32>,
    %c0_13 = arith.constant 0 : index
    %c1 = arith.constant 1 : index
    %c0_14 = arith.constant 0 : index
    %13 = vector.load %arg7[%c0_13, %c1, %c0_14] : memref<1x17x32xf32, #tpu.memory_space<vmem>>, vector<1x16x32xf32>
    %14 = vector.shape_cast %13 : vector<1x16x32xf32> to vector<16x32xf32>
    %15 = vector.shape_cast %8 : vector<16x32xf32> to vector<1x16x32xf32>
    tpu.vector_store %arg7[%c0_13, %c1, %c0_14], %15 {strides = array<i32>} : memref<1x17x32xf32, #tpu.memory_space<vmem>>, vector<1x16x32xf32>,
    return
  }
  func.func @transform_0(%arg0: i32, %arg1: i32) -> (i32, i32, i32) {
    %c0_i32 = arith.constant 0 : i32
    %c0_i32_0 = arith.constant 0 : i32
    %c0_i32_1 = arith.constant 0 : i32
    return %arg0, %c0_i32, %c0_i32_0 : i32, i32, i32
  }
  func.func @transform_1(%arg0: i32, %arg1: i32) -> (i32, i32) {
    %c0_i32 = arith.constant 0 : i32
    %c0_i32_0 = arith.constant 0 : i32
    return %c0_i32, %arg1 : i32, i32
  }
  func.func @transform_2(%arg0: i32, %arg1: i32) -> (i32, i32) {
    %c0_i32 = arith.constant 0 : i32
    %c0_i32_0 = arith.constant 0 : i32
    return %c0_i32, %arg1 : i32, i32
  }
  func.func @transform_3(%arg0: i32, %arg1: i32) -> (i32, i32) {
    %c0_i32 = arith.constant 0 : i32
    %c0_i32_0 = arith.constant 0 : i32
    return %c0_i32, %arg1 : i32, i32
  }
  func.func @transform_4(%arg0: i32, %arg1: i32) -> (i32, i32) {
    %c0_i32 = arith.constant 0 : i32
    %c0_i32_0 = arith.constant 0 : i32
    return %c0_i32, %arg1 : i32, i32
  }
  func.func @transform_5(%arg0: i32, %arg1: i32) -> (i32, i32, i32) {
    %c0_i32 = arith.constant 0 : i32
    %c0_i32_0 = arith.constant 0 : i32
    return %arg0, %c0_i32, %arg1 : i32, i32, i32
  }
}

</mosaic_0001>

<llo_original>
// kernel: tpu_custom_call.1
$region0: #{tpu_custom_call.1}
  #allocation0 [shape = 'u32[]', space=smem, size = 0x4, offset = 0x4, fixed_abs, tag = 'smem constant byte address 0x4 - core index']
  #allocation1 [shape = 'u32[144,128]{1,0:T(1,128)}', space=vmem, size = 0x12000, scoped, tag = 'internal scratch']
  %s0 = inlined_call_operand.vmem [shape: bf16[2,16,64], index: 0, kind: input, shape index: {}]
  %s1 = inlined_call_operand.vmem [shape: bf16[64,32], index: 1, kind: input, shape index: {}]
  %s2 = inlined_call_operand.vmem [shape: f32[1,32], index: 2, kind: input, shape index: {}]
  %s3 = inlined_call_operand.vmem [shape: f32[1,32], index: 3, kind: input, shape index: {}]
  %s4 = inlined_call_operand.vmem [shape: f32[16,32], index: 4, kind: input, shape index: {}]
  %s5 = inlined_call_operand.vmem [shape: f32[2,17,32], index: 5, kind: output, shape index: {}]
  %s6 = sld [smem:[#allocation0]]
  $region53: #{tpu_custom_call.1} parent=0
    _
  %s8 = ssub.s32 1, %s6
  %s9 = scalar_select 0, %s8, %s6
  loop: start=0, step=1, limit=4
  $region2: #{tpu_custom_call.1} parent=0 // loop_pre_header
    _
  $region3: #{tpu_custom_call.1} parent=0 // loop_header
    %s11 = sphi 0, %s15
    %p12 = scmp.ge.s32.totalorder %s11, 4
    %s18 = sphi 0, %s30
    %s19 = sphi 0, %s26
    %s20 = sphi 0, %s18
    %s21 = sphi 0, %s19
    %s22 = sphi 0, %s20
    %s23 = sphi 0, %s21
    %s33 = sphi 0, %s35
    %s36 = sphi 0, %s33
    %s37 = sphi 0, %s36
    %s53 = sphi 0, %s37
    %s59 = sphi 0, %s61
    %s62 = sphi 0, %s59
    %s63 = sphi 0, %s62
    %s79 = sphi 0, %s63
    %s85 = sphi 0, %s87
    %s88 = sphi 0, %s85
    %s89 = sphi 0, %s88
    %s105 = sphi 0, %s89
    %s111 = sphi 0, %s113
    %s114 = sphi 0, %s111
    %s115 = sphi 0, %s114
    %s131 = sphi 0, %s115
    %s137 = sphi 0, %s139
    %s140 = sphi 0, %s137
    %s141 = sphi 0, %s140
    %s157 = sphi 0, %s141
    %s165 = sphi 0, %s167
    %s168 = sphi 0, %s165
    %s169 = sphi 0, %s168
    %s185 = sphi 0, %s169
  $region4: #{tpu_custom_call.1} parent=0 // loop_header_branch
    %14 = sbr.rel (%p12) target = $region8
  $region5: #{tpu_custom_call.1} parent=0 // loop_body
    %s16 = ssub.s32 %s11, 1
    %s17 = ssub.s32 %s11, 2
    %s24 = sadd.s32 1, %s19
    %p25 = scmp.ge.s32.totalorder %s24, 1
    %s26 = scalar_select %p25, 0, %s24
    %s27 = sadd.s32 1, %s18
    %s28 = scalar_select %p25, %s27, %s18
    %p29 = scmp.ge.s32.totalorder %s28, 2
    %s30 = scalar_select %p29, 0, %s28
    %s31 = ssub.s32 %s18, %s30
    %p32 = scmp.eq.s32.totalorder %s31, 0
    %s34 = sadd.s32 %s33, 1
    %s35 = scalar_select %p32, %s33, %s34
    %p38 = pneg %p32
    %p39 = scmp.eq.s32.totalorder %s11, 1
    %p40 = por %p38, %p39
    %p41 = scmp.ne.s32.totalorder %s33, %s36
    %p42 = scmp.eq.s32.totalorder %s11, 0
    %p43 = por %p41, %p42
    %p44 = scmp.ne.s32.totalorder %s33, %s36
    %p45 = scmp.eq.s32.totalorder %s16, 1
    %p46 = por %p44, %p45
    %p47 = scmp.ne.s32.totalorder %s36, %s37
    %p48 = scmp.eq.s32.totalorder %s16, 0
    %p49 = por %p47, %p48
    %p50 = scmp.ne.s32.totalorder %s36, %s37
    %p51 = scmp.eq.s32.totalorder %s17, 1
    %p52 = por %p50, %p51
    %p54 = scmp.ne.s32.totalorder %s37, %s53
    %p55 = scmp.eq.s32.totalorder %s17, 0
    %p56 = por %p54, %p55
    %s57 = ssub.s32 %s19, %s26
    %p58 = scmp.eq.s32.totalorder %s57, 0
    %s60 = sadd.s32 %s59, 1
    %s61 = scalar_select %p58, %s59, %s60
    %p64 = pneg %p58
    %p65 = scmp.eq.s32.totalorder %s11, 1
    %p66 = por %p64, %p65
    %p67 = scmp.ne.s32.totalorder %s59, %s62
    %p68 = scmp.eq.s32.totalorder %s11, 0
    %p69 = por %p67, %p68
    %p70 = scmp.ne.s32.totalorder %s59, %s62
    %p71 = scmp.eq.s32.totalorder %s16, 1
    %p72 = por %p70, %p71
    %p73 = scmp.ne.s32.totalorder %s62, %s63
    %p74 = scmp.eq.s32.totalorder %s16, 0
    %p75 = por %p73, %p74
    %p76 = scmp.ne.s32.totalorder %s62, %s63
    %p77 = scmp.eq.s32.totalorder %s17, 1
    %p78 = por %p76, %p77
    %p80 = scmp.ne.s32.totalorder %s63, %s79
    %p81 = scmp.eq.s32.totalorder %s17, 0
    %p82 = por %p80, %p81
    %s83 = ssub.s32 %s19, %s26
    %p84 = scmp.eq.s32.totalorder %s83, 0
    %s86 = sadd.s32 %s85, 1
    %s87 = scalar_select %p84, %s85, %s86
    %p90 = pneg %p84
    %p91 = scmp.eq.s32.totalorder %s11, 1
    %p92 = por %p90, %p91
    %p93 = scmp.ne.s32.totalorder %s85, %s88
    %p94 = scmp.eq.s32.totalorder %s11, 0
    %p95 = por %p93, %p94
    %p96 = scmp.ne.s32.totalorder %s85, %s88
    %p97 = scmp.eq.s32.totalorder %s16, 1
    %p98 = por %p96, %p97
    %p99 = scmp.ne.s32.totalorder %s88, %s89
    %p100 = scmp.eq.s32.totalorder %s16, 0
    %p101 = por %p99, %p100
    %p102 = scmp.ne.s32.totalorder %s88, %s89
    %p103 = scmp.eq.s32.totalorder %s17, 1
    %p104 = por %p102, %p103
    %p106 = scmp.ne.s32.totalorder %s89, %s105
    %p107 = scmp.eq.s32.totalorder %s17, 0
    %p108 = por %p106, %p107
    %s109 = ssub.s32 %s19, %s26
    %p110 = scmp.eq.s32.totalorder %s109, 0
    %s112 = sadd.s32 %s111, 1
    %s113 = scalar_select %p110, %s111, %s112
    %p116 = pneg %p110
    %p117 = scmp.eq.s32.totalorder %s11, 1
    %p118 = por %p116, %p117
    %p119 = scmp.ne.s32.totalorder %s111, %s114
    %p120 = scmp.eq.s32.totalorder %s11, 0
    %p121 = por %p119, %p120
    %p122 = scmp.ne.s32.totalorder %s111, %s114
    %p123 = scmp.eq.s32.totalorder %s16, 1
    %p124 = por %p122, %p123
    %p125 = scmp.ne.s32.totalorder %s114, %s115
    %p126 = scmp.eq.s32.totalorder %s16, 0
    %p127 = por %p125, %p126
    %p128 = scmp.ne.s32.totalorder %s114, %s115
    %p129 = scmp.eq.s32.totalorder %s17, 1
    %p130 = por %p128, %p129
    %p132 = scmp.ne.s32.totalorder %s115, %s131
    %p133 = scmp.eq.s32.totalorder %s17, 0
    %p134 = por %p132, %p133
    %s135 = ssub.s32 %s19, %s26
    %p136 = scmp.eq.s32.totalorder %s135, 0
    %s138 = sadd.s32 %s137, 1
    %s139 = scalar_select %p136, %s137, %s138
    %p142 = pneg %p136
    %p143 = scmp.eq.s32.totalorder %s11, 1
    %p144 = por %p142, %p143
    %p145 = scmp.ne.s32.totalorder %s137, %s140
    %p146 = scmp.eq.s32.totalorder %s11, 0
    %p147 = por %p145, %p146
    %p148 = scmp.ne.s32.totalorder %s137, %s140
    %p149 = scmp.eq.s32.totalorder %s16, 1
    %p150 = por %p148, %p149
    %p151 = scmp.ne.s32.totalorder %s140, %s141
    %p152 = scmp.eq.s32.totalorder %s16, 0
    %p153 = por %p151, %p152
    %p154 = scmp.ne.s32.totalorder %s140, %s141
    %p155 = scmp.eq.s32.totalorder %s17, 1
    %p156 = por %p154, %p155
    %p158 = scmp.ne.s32.totalorder %s141, %s157
    %p159 = scmp.eq.s32.totalorder %s17, 0
    %p160 = por %p158, %p159
    %s161 = ssub.s32 %s18, %s30
    %s162 = ssub.s32 %s19, %s26
    %s163 = sor.u32 %s161, %s162
    %p164 = scmp.eq.s32.totalorder %s163, 0
    %s166 = sadd.s32 %s165, 1
    %s167 = scalar_select %p164, %s165, %s166
    %p170 = pneg %p164
    %p171 = scmp.eq.s32.totalorder %s11, 1
    %p172 = por %p170, %p171
    %p173 = scmp.ne.s32.totalorder %s165, %s168
    %p174 = scmp.eq.s32.totalorder %s11, 0
    %p175 = por %p173, %p174
    %p176 = scmp.ne.s32.totalorder %s165, %s168
    %p177 = scmp.eq.s32.totalorder %s16, 1
    %p178 = por %p176, %p177
    %p179 = scmp.ne.s32.totalorder %s168, %s169
    %p180 = scmp.eq.s32.totalorder %s16, 0
    %p181 = por %p179, %p180
    %p182 = scmp.ne.s32.totalorder %s168, %s169
    %p183 = scmp.eq.s32.totalorder %s17, 1
    %p184 = por %p182, %p183
    %p186 = scmp.ne.s32.totalorder %s169, %s185
    %p187 = scmp.eq.s32.totalorder %s17, 0
    %p188 = por %p186, %p187
    %p189 = scmp.le.s32.totalorder 1, %s11
    %p190 = scmp.lt.s32.totalorder %s11, 3
    %p191 = pnand %p189, %p190
    %p192 = pneg %p191
    // Predicated region
    $region9: #{tpu_custom_call.1} parent=5 // pred_check
      _
    $region10: #{tpu_custom_call.1} parent=5 // pred_check_branch
      %194 = sbr.rel (%p191) target = $region12
    $region11: #{tpu_custom_call.1} parent=5 // pred_region
      %s195 = ssub.s32 %s11, 1
      // Predicated region
      $region13: #{tpu_custom_call.1} parent=11 // pred_check
        %p196 = pneg %p75
      $region14: #{tpu_custom_call.1} parent=11 // pred_check_branch
        %198 = sbr.rel (%p196) target = $region16
      $region15: #{tpu_custom_call.1} parent=11 // pred_region
        %p199 = scmp.lt.s32.totalorder %s21, 0
        %s200 = scalar_select %p199, %s21, 0
        %s201 = smul.addr %s200, 4
        %s202 = scalar_lea.vmem %s1, %s201
      $region16: #{tpu_custom_call.1} parent=11 // pred_fallthru
        _
      // Predicated region
      $region17: #{tpu_custom_call.1} parent=11 // pred_check
        %p203 = pneg %p101
      $region18: #{tpu_custom_call.1} parent=11 // pred_check_branch
        %205 = sbr.rel (%p203) target = $region20
      $region19: #{tpu_custom_call.1} parent=11 // pred_region
        %p206 = scmp.lt.s32.totalorder %s21, 0
        %s207 = scalar_select %p206, %s21, 0
        %s208 = scalar_lea.vmem %s2, %s207
      $region20: #{tpu_custom_call.1} parent=11 // pred_fallthru
        _
      // Predicated region
      $region21: #{tpu_custom_call.1} parent=11 // pred_check
        %p209 = pneg %p127
      $region22: #{tpu_custom_call.1} parent=11 // pred_check_branch
        %211 = sbr.rel (%p209) target = $region24
      $region23: #{tpu_custom_call.1} parent=11 // pred_region
        %p212 = scmp.lt.s32.totalorder %s21, 0
        %s213 = scalar_select %p212, %s21, 0
        %s214 = scalar_lea.vmem %s3, %s213
      $region24: #{tpu_custom_call.1} parent=11 // pred_fallthru
        _
      // Predicated region
      $region25: #{tpu_custom_call.1} parent=11 // pred_check
        %p215 = pneg %p153
      $region26: #{tpu_custom_call.1} parent=11 // pred_check_branch
        %217 = sbr.rel (%p215) target = $region28
      $region27: #{tpu_custom_call.1} parent=11 // pred_region
        %p218 = scmp.lt.s32.totalorder %s21, 0
        %s219 = scalar_select %p218, %s21, 0
        %s220 = smul.addr %s219, 8
        %s221 = scalar_lea.vmem %s4, %s220
      $region28: #{tpu_custom_call.1} parent=11 // pred_fallthru
        _
    $region12: #{tpu_custom_call.1} parent=5 // pred_fallthru
      _
    %p222 = scmp.lt.s32.totalorder %s11, 2
    // Predicated region
    $region29: #{tpu_custom_call.1} parent=5 // pred_check
      %p223 = pneg %p222
    $region30: #{tpu_custom_call.1} parent=5 // pred_check_branch
      %225 = sbr.rel (%p223) target = $region32
    $region31: #{tpu_custom_call.1} parent=5 // pred_region
      // Predicated region
      $region33: #{tpu_custom_call.1} parent=31 // pred_check
        %p226 = pneg %p43
      $region34: #{tpu_custom_call.1} parent=31 // pred_check_branch
        %228 = sbr.rel (%p226) target = $region36
      $region35: #{tpu_custom_call.1} parent=31 // pred_region
        %p229 = scmp.lt.s32.totalorder %s18, 1
        %s230 = scalar_select %p229, %s18, 1
        %s231 = smul.addr %s230, 2
        %s232 = smul.addr %s231, 4
        %s233 = scalar_lea.vmem %s0, %s232
      $region36: #{tpu_custom_call.1} parent=31 // pred_fallthru
        _
    $region32: #{tpu_custom_call.1} parent=5 // pred_fallthru
      _
    %p234 = scmp.le.s32.totalorder 1, %s11
    %p235 = scmp.lt.s32.totalorder %s11, 3
    %p236 = pnand %p234, %p235
    %p237 = pneg %p236
    // Predicated region
    $region37: #{tpu_custom_call.1} parent=5 // pred_check
      _
    $region38: #{tpu_custom_call.1} parent=5 // pred_check_branch
      %239 = sbr.rel (%p236) target = $region40
    $region39: #{tpu_custom_call.1} parent=5 // pred_region
      %s240 = ssub.s32 %s11, 1
      %p241 = scmp.lt.s32.totalorder %s20, 1
      %s242 = scalar_select %p241, %s20, 1
      %s243 = smul.addr %s242, 2
      %s244 = smul.addr %s243, 4
      %s245 = scalar_lea.vmem %s0, %s244
      %p246 = pneg %p49
      %p247 = pneg %p46
      %p248 = scmp.lt.s32.totalorder %s21, 0
      %s249 = scalar_select %p248, %s21, 0
      %s250 = smul.addr %s249, 4
      %s251 = scalar_lea.vmem %s1, %s250
      %p252 = pneg %p75
      %p253 = pneg %p72
      %p254 = scmp.lt.s32.totalorder %s21, 0
      %s255 = scalar_select %p254, %s21, 0
      %s256 = scalar_lea.vmem %s2, %s255
      %p257 = pneg %p101
      %p258 = pneg %p98
      %p259 = scmp.lt.s32.totalorder %s21, 0
      %s260 = scalar_select %p259, %s21, 0
      %s261 = scalar_lea.vmem %s3, %s260
      %p262 = pneg %p127
      %p263 = pneg %p124
      %p264 = scmp.lt.s32.totalorder %s21, 0
      %s265 = scalar_select %p264, %s21, 0
      %s266 = smul.addr %s265, 8
      %s267 = scalar_lea.vmem %s4, %s266
      %p268 = pneg %p153
      %p269 = pneg %p150
      %p270 = pneg %p181
      %p271 = pneg %p178
      %p272 = scmp.lt.s32.totalorder %s20, 1
      %s273 = scalar_select %p272, %s20, 1
      %p274 = scmp.lt.s32.totalorder %s21, 0
      %s275 = scalar_select %p274, %s21, 0
      %s276 = smul.addr %s273, 3
      %s277 = sadd.s32 %s275, %s276
      %s278 = smul.addr %s277, 8
      %s279 = scalar_lea.vmem %s5, %s278
      %p280 = scmp.lt.s32.totalorder %s20, 1
      %s281 = scalar_select %p280, %s20, 1
      %s282 = smul.addr %s281, 2
      %s283 = smul.addr %s282, 4
      %s284 = scalar_lea.vmem %s0, %s283
      %p285 = scmp.lt.s32.totalorder %s21, 0
      %s286 = scalar_select %p285, %s21, 0
      %s287 = smul.addr %s286, 4
      %s288 = scalar_lea.vmem %s1, %s287
      %p289 = scmp.lt.s32.totalorder %s21, 0
      %s290 = scalar_select %p289, %s21, 0
      %s291 = scalar_lea.vmem %s2, %s290
      %p292 = scmp.lt.s32.totalorder %s21, 0
      %s293 = scalar_select %p292, %s21, 0
      %s294 = scalar_lea.vmem %s3, %s293
      %p295 = scmp.lt.s32.totalorder %s21, 0
      %s296 = scalar_select %p295, %s21, 0
      %s297 = smul.addr %s296, 8
      %s298 = scalar_lea.vmem %s4, %s297
      %p299 = scmp.lt.s32.totalorder %s20, 1
      %s300 = scalar_select %p299, %s20, 1
      %p301 = scmp.lt.s32.totalorder %s21, 0
      %s302 = scalar_select %p301, %s21, 0
      %s303 = smul.addr %s300, 3
      %s304 = sadd.s32 %s302, %s303
      %s305 = smul.addr %s304, 8
      %s306 = scalar_lea.vmem %s5, %s305
      %v308 = vld [vmem:[%s284] sm:$0xf]
      %v309 = vld [vmem:[%s284 + $0x4] sm:$0xf]
      %v310 = vld [vmem:[%s288] sm:$0xf]
      %v311 = vld [vmem:[%s288 + $0x4] sm:$0xf]
      %v312 = vld [vmem:[%s288 + $0x8] sm:$0xf]
      %v313 = vld [vmem:[%s288 + $0xc] sm:$0xf]
      %v314 = vld [vmem:[%s288 + $0x10] sm:$0xf]
      %v315 = vld [vmem:[%s288 + $0x14] sm:$0xf]
      %v316 = vld [vmem:[%s288 + $0x18] sm:$0xf]
      %v317 = vld [vmem:[%s288 + $0x1c] sm:$0xf]
      %v318 = vld [vmem:[%s291] sm:$0x1]
      %v320 = vlaneseq
      %v321 = vshrl.u32 %v320, 7
      %v322 = vsub.s32 0, %v321
      %v323 = vrot.slane %v318, %v322
      %v327 = vunpack.c.l.b16 %v308
      %v328 = vunpack.c.l.b16 %v309
      %v329 = vpack.c.b16 %v328, %v327
      %v338 = vunpack.c.l.b16 %v310
      %v339 = vunpack.c.l.b16 %v311
      %v340 = vunpack.c.l.b16 %v312
      %v341 = vunpack.c.l.b16 %v313
      %v342 = vunpack.c.l.b16 %v314
      %v343 = vunpack.c.l.b16 %v315
      %v344 = vunpack.c.l.b16 %v316
      %v345 = vunpack.c.l.b16 %v317
      %v346 = vpack.c.b16 %v339, %v338
      %v347 = vpack.c.b16 %v341, %v340
      %v348 = vpack.c.b16 %v343, %v342
      %v349 = vpack.c.b16 %v345, %v344
      %vm354 = vcmask 523264
      %v356 = vsel %vm354, %v329, 0
      %358 = vmatprep.subr.bf16.mxu0 0
      %359 = vmatpush1.bf16.msra.mxu0 %v346
      %360 = vmatprep.subr.bf16.mxu0 0
      %361 = vmatpush1.bf16.msra.mxu0 %v347
      %362 = vmatprep.subr.bf16.mxu0 0
      %363 = vmatpush1.bf16.msra.mxu0 %v348
      %364 = vmatprep.subr.bf16.mxu0 0
      %365 = vmatpush1.bf16.msra.mxu0 %v349
      %366 = vmatprep.subr.bf16.mxu0 0
      %367 = vmatpush1.bf16.msra.mxu0 0
      %368 = vmatprep.subr.bf16.mxu0 0
      %369 = vmatpush1.bf16.msra.mxu0 0
      %370 = vmatprep.subr.bf16.mxu0 0
      %371 = vmatpush1.bf16.msra.mxu0 0
      %372 = vmatprep.subr.bf16.mxu0 0
      %373 = vmatpush1.bf16.msra.mxu0 0
      %374 = vmatprep.subr.bf16.mxu0 0
      %375 = vmatpush1.bf16.msra.mxu0 0
      %376 = vmatprep.subr.bf16.mxu0 0
      %377 = vmatpush1.bf16.msra.mxu0 0
      %378 = vmatprep.subr.bf16.mxu0 0
      %379 = vmatpush1.bf16.msra.mxu0 0
      %380 = vmatprep.subr.bf16.mxu0 0
      %381 = vmatpush1.bf16.msra.mxu0 0
      %382 = vmatprep.subr.bf16.mxu0 0
      %383 = vmatpush1.bf16.msra.mxu0 0
      %384 = vmatprep.subr.bf16.mxu0 0
      %385 = vmatpush1.bf16.msra.mxu0 0
      %386 = vmatprep.subr.bf16.mxu0 0
      %387 = vmatpush1.bf16.msra.mxu0 0
      %388 = vmatprep.subr.bf16.mxu0 0
      %389 = vmatpush1.bf16.msra.mxu0 0
      %390 = vmatprep.mubr.bf16.mxu0 0
      %391 = vmatmul.mubr.bf16.gmra.mrb[0].mxu0 %v356
      %v392 = vpop.f32.mrb[0].mxu0
      %v393 = vadd.f32 %v323, %v392
      %v394 = vpop.f32.mrb[0].mxu0
      %v395 = vpop.f32.mrb[0].mxu0
      %v396 = vadd.f32 %v323, %v395
      %v397 = vpop.f32.mrb[0].mxu0
      %398 = vdwg.mxu0
      %v399 = vld [vmem:[%s298] sm:$0xff]
      %v400 = vld [vmem:[%s298 + $0x8] sm:$0xff]
      %v401 = vadd.f32 %v393, %v399
      %v402 = vadd.f32 %v396, %v400
      %v403 = vld [vmem:[%s294] sm:$0x1]
      %vm404 = vcmask 253952
      %405 = vst.msk [vmem:[%s306] sm:$0x1] %vm404, %v403
      %vm406 = vcmask 261120
      %407 = vst.msk [vmem:[%s306 + $0x1] sm:$0xff] %vm406, %v401
      %408 = vst.msk [vmem:[%s306 + $0x9] sm:$0xff] %vm406, %v402
      %p409 = scmp.lt.s32.totalorder %s20, 1
      %s410 = scalar_select %p409, %s20, 1
      %p411 = scmp.lt.s32.totalorder %s21, 0
      %s412 = scalar_select %p411, %s21, 0
      %s413 = smul.addr %s410, 3
      %s414 = sadd.s32 %s412, %s413
      %s415 = smul.addr %s414, 8
      %s416 = scalar_lea.vmem %s5, %s415
      // Predicated region
      $region41: #{tpu_custom_call.1} parent=39 // pred_check
        %p417 = pneg %p178
      $region42: #{tpu_custom_call.1} parent=39 // pred_check_branch
        %419 = sbr.rel (%p417) target = $region44
      $region43: #{tpu_custom_call.1} parent=39 // pred_region
        _
      $region44: #{tpu_custom_call.1} parent=39 // pred_fallthru
        _
    $region40: #{tpu_custom_call.1} parent=5 // pred_fallthru
      _
    %p420 = scmp.le.s32.totalorder 2, %s11
    // Predicated region
    $region45: #{tpu_custom_call.1} parent=5 // pred_check
      %p421 = pneg %p420
    $region46: #{tpu_custom_call.1} parent=5 // pred_check_branch
      %423 = sbr.rel (%p421) target = $region48
    $region47: #{tpu_custom_call.1} parent=5 // pred_region
      %s424 = ssub.s32 %s11, 2
      // Predicated region
      $region49: #{tpu_custom_call.1} parent=47 // pred_check
        %p425 = pneg %p184
      $region50: #{tpu_custom_call.1} parent=47 // pred_check_branch
        %427 = sbr.rel (%p425) target = $region52
      $region51: #{tpu_custom_call.1} parent=47 // pred_region
        %p428 = scmp.lt.s32.totalorder %s22, 1
        %s429 = scalar_select %p428, %s22, 1
        %p430 = scmp.lt.s32.totalorder %s23, 0
        %s431 = scalar_select %p430, %s23, 0
        %s432 = smul.addr %s429, 3
        %s433 = sadd.s32 %s431, %s432
        %s434 = smul.addr %s433, 8
        %s435 = scalar_lea.vmem %s5, %s434
      $region52: #{tpu_custom_call.1} parent=47 // pred_fallthru
        _
    $region48: #{tpu_custom_call.1} parent=5 // pred_fallthru
      _
  $region6: #{tpu_custom_call.1} parent=0 // loop_footer
    %s15 = sadd.s32 1, %s11
  $region7: #{tpu_custom_call.1} parent=0 // loop_footer_branch
    %10 = sbr.rel target = $region3
  $region8: #{tpu_custom_call.1} parent=0 // loop_exit
    _

</llo_original>
